<compile_context>
chip_gen: v6e
topology: v6e:2x2x1
jax: 0.10.0
libtpu: 0.0.40
codegen_flags: <defaults>
</compile_context>

<pallas_src>
import functools

import jax
import jax.numpy as jnp
from jax.experimental import pallas as pl
from jax.experimental.pallas import tpu as pltpu


_L2_EPS = 1e-12  # torch F.normalize default eps


def _gather_l2norm_kernel(idx_ref, emb_ref, out_ref):
    """Gather `tm` rows of the embedding table and L2-normalize each row.

    idx_ref : SMEM (n_pad,) int32  -- scalar-prefetched row indices
    emb_ref : VMEM (N, C) float32  -- full table (constant block index ->
                                      DMA'd from HBM once, stays resident)
    out_ref : VMEM (tm, C) float32 -- lane-dense output block
    """
    i = pl.program_id(0)
    tm = out_ref.shape[0]
    base = i * tm

    # Row gather: dynamic-row VMEM loads straight into the dense output tile
    # (no per-row HBM DMA descriptors).
    @pl.loop(0, tm)
    def _(r):
        row = idx_ref[base + r]
        out_ref[pl.ds(r, 1), :] = emb_ref[pl.ds(row, 1), :]

    # Vectorised L2 normalisation over the whole (tm, C) tile:
    # matches F.normalize: x / max(||x||_2, eps).
    v = out_ref[...]
    ssq = jnp.sum(v * v, axis=-1, keepdims=True)        # (tm, 1) lane reduce
    inv = 1.0 / jnp.maximum(jnp.sqrt(ssq), _L2_EPS)     # tiny (tm, 1) divide
    out_ref[...] = v * inv


def _round_up(v, m):
    return (v + m - 1) // m * m


@functools.partial(jax.jit, static_argnames=("tm",))
def neighbor_embedding1_forward(x, embedding, *, tm=1024):
    """x: (2, P) int node indices (drug ids, disease ids); embedding: (N, C).

    Returns (drug_embedding, disease_embedding), each (P, C), L2-normalized.
    bgnn (BGCNA) and dropout are identity here (see TODOs above).
    """
    num_nodes, c = embedding.shape
    p = x.shape[1]
    emb = embedding

    # Fuse drug + disease gathers into one kernel launch; clip keeps every
    # gathered row in-bounds (torch would raise on an OOB index).
    idx_all = jnp.clip(x.reshape(-1).astype(jnp.int32), 0, num_nodes - 1)
    n = idx_all.shape[0]  # = 2 * P

    # --- row-tile selection ------------------------------------------------
    # Big tiles amortise per-grid-step overhead; keep >= 2 grid steps when
    # there is plenty of work so v7x's two TensorCores both run.  Rows only
    # need to be a multiple of 8 (the lane dim C is the full array dim).
    tm_eff = min(tm, n)
    if n >= 1024:
        tm_eff = min(tm_eff, (n + 1) // 2)
    tm_eff = max(8, _round_up(tm_eff, 8))

    # Pad ONLY the tiny int32 index vector (never the embedding table) so the
    # grid divides evenly; padded rows gather row 0 and are sliced off below.
    n_pad = _round_up(n, tm_eff)
    if n_pad != n:
        idx_all = jnp.pad(idx_all, (0, n_pad - n))

    out = pl.pallas_call(
        _gather_l2norm_kernel,
        out_shape=jax.ShapeDtypeStruct((n_pad, c), emb.dtype),
        grid_spec=pltpu.PrefetchScalarGridSpec(
            num_scalar_prefetch=1,
            grid=(n_pad // tm_eff,),
            in_specs=[
                # Full embedding table; block index is constant, so it is
                # copied HBM->VMEM once and stays resident across grid steps.
                pl.BlockSpec((num_nodes, c), lambda i, idx: (0, 0)),
            ],
            out_specs=pl.BlockSpec((tm_eff, c), lambda i, idx: (i, 0)),
        ),
        compiler_params=pltpu.CompilerParams(
            dimension_semantics=("parallel",),
        ),
        cost_estimate=pl.CostEstimate(
            flops=3 * n_pad * c,
            transcendentals=n_pad,
            bytes_accessed=(num_nodes * c + 2 * n_pad * c) * 4,
        ),
    )(idx_all, emb)

    drug_embedding = out[:p]
    disease_embedding = out[p:n]
    return drug_embedding, disease_embedding


def _reference(x, embedding):
    # Pure-JAX reference (bgnn + dropout treated as identity, like the kernel).
    def gather_norm(ids):
        g = embedding[ids]
        nrm = jnp.maximum(jnp.sqrt(jnp.sum(g * g, axis=-1, keepdims=True)), _L2_EPS)
        return g / nrm
    return gather_norm(x[0]), gather_norm(x[1])


if __name__ == "__main__":
    key = jax.random.PRNGKey(0)
    k_emb, k_drug, k_dis = jax.random.split(key, 3)

    # Small shapes consistent with the module: (num_nodes, out_channels) node
    # embeddings and a (2, P) drug/disease index pair list.
    num_nodes, out_channels, num_pairs = 64, 128, 200
    embedding = jax.random.normal(k_emb, (num_nodes, out_channels), jnp.float32)
    drug_ids = jax.random.randint(k_drug, (num_pairs,), 0, num_nodes, jnp.int32)
    dis_ids = jax.random.randint(k_dis, (num_pairs,), 0, num_nodes, jnp.int32)
    x = jnp.stack([drug_ids, dis_ids])  # (2, P), like the torch `x`

    # tm=256 so this small demo still exercises a 2-step grid + index padding;
    # the default tm=1024 is what large workloads should use.
    drug_emb, dis_emb = neighbor_embedding1_forward(x, embedding, tm=256)
    drug_emb = jax.block_until_ready(drug_emb)
    dis_emb = jax.block_until_ready(dis_emb)

    ref_drug, ref_dis = _reference(x, embedding)
    assert drug_emb.shape == (num_pairs, out_channels), drug_emb.shape
    assert dis_emb.shape == (num_pairs, out_channels), dis_emb.shape
    max_err = max(float(jnp.max(jnp.abs(drug_emb - ref_drug))),
                  float(jnp.max(jnp.abs(dis_emb - ref_dis))))
    assert max_err < 1e-5, max_err

    print("KERNEL_OK")
</pallas_src>

<mosaic_0001>
module attributes {stable_mosaic.version = 11 : i64} {
  func.func @_gather_l2norm_kernel(%arg0: i32, %arg1: memref<512xi32, #tpu.memory_space<smem>>, %arg2: memref<64x128xf32, #tpu.memory_space<vmem>>, %arg3: memref<256x128xf32, #tpu.memory_space<vmem>>) attributes {dimension_semantics = [#tpu.dimension_semantics<parallel>], iteration_bounds = array<i64: 2>, scalar_prefetch = 1 : i64, scratch_operands = 0 : i64, tpu.core_type = #tpu.core_type<tc>, window_params = [{pipeline_mode = #tpu.pipeline_mode<synchronous>, transform_indices = @transform_0, window_bounds = array<i64: 64, 128>}, {transform_indices = @transform_1, window_bounds = array<i64: 256, 128>}]} {
    %c256_i32 = arith.constant 256 : i32
    %0 = arith.muli %arg0, %c256_i32 : i32
    %c0_i32 = arith.constant 0 : i32
    %c256_i32_0 = arith.constant 256 : i32
    %1 = arith.addi %c0_i32, %c256_i32_0 : i32
    %c1_i32 = arith.constant 1 : i32
    scf.for %arg4 = %c0_i32 to %1 step %c1_i32  : i32 {
      %c1_i32_7 = arith.constant 1 : i32
      %14 = arith.muli %arg4, %c1_i32_7 : i32
      %c0_i32_8 = arith.constant 0 : i32
      %15 = arith.addi %c0_i32_8, %14 : i32
      %16 = arith.addi %0, %15 : i32
      %17 = arith.index_cast %16 : i32 to index
      %18 = memref.load %arg1[%17] : memref<512xi32, #tpu.memory_space<smem>>
      %19 = arith.index_cast %18 : i32 to index
      %c0_9 = arith.constant 0 : index
      %20 = vector.load %arg2[%19, %c0_9] : memref<64x128xf32, #tpu.memory_space<vmem>>, vector<1x128xf32>
      %21 = arith.index_cast %15 : i32 to index
      %c0_10 = arith.constant 0 : index
      %22 = vector.load %arg3[%21, %c0_10] : memref<256x128xf32, #tpu.memory_space<vmem>>, vector<1x128xf32>
      tpu.vector_store %arg3[%21, %c0_10], %20 {strides = array<i32>} : memref<256x128xf32, #tpu.memory_space<vmem>>, vector<1x128xf32>,
    }
    %c256_i32_1 = arith.constant 256 : i32
    %c0 = arith.constant 0 : index
    %c0_2 = arith.constant 0 : index
    %2 = vector.load %arg3[%c0, %c0_2] : memref<256x128xf32, #tpu.memory_space<vmem>>, vector<256x128xf32>
    %3 = arith.mulf %2, %2 : vector<256x128xf32>
    %cst = arith.constant dense<0.000000e+00> : vector<256xf32>
    %4 = vector.multi_reduction <add>, %3, %cst [1] : vector<256x128xf32> to vector<256xf32>
    %5 = vector.shape_cast %4 : vector<256xf32> to vector<256x1xf32>
    %6 = math.sqrt %5 : vector<256x1xf32>
    %cst_3 = arith.constant 9.99999996E-13 : f32
    %7 = vector.broadcast %cst_3 : f32 to vector<256x1xf32>
    %8 = arith.maximumf %6, %7 : vector<256x1xf32>
    %cst_4 = arith.constant 1.000000e+00 : f32
    %9 = vector.broadcast %cst_4 : f32 to vector<256x1xf32>
    %10 = arith.divf %9, %8 : vector<256x1xf32>
    %11 = vector.broadcast %10 : vector<256x1xf32> to vector<256x128xf32>
    %12 = arith.mulf %2, %11 : vector<256x128xf32>
    %c0_5 = arith.constant 0 : index
    %c0_6 = arith.constant 0 : index
    %13 = vector.load %arg3[%c0_5, %c0_6] : memref<256x128xf32, #tpu.memory_space<vmem>>, vector<256x128xf32>
    tpu.vector_store %arg3[%c0_5, %c0_6], %12 {strides = array<i32>} : memref<256x128xf32, #tpu.memory_space<vmem>>, vector<256x128xf32>,
    return
  }
  func.func @transform_0(%arg0: i32, %arg1: memref<512xi32, #tpu.memory_space<smem>>) -> (i32, i32) {
    %c0_i32 = arith.constant 0 : i32
    %c0_i32_0 = arith.constant 0 : i32
    %c0_i32_1 = arith.constant 0 : i32
    return %c0_i32, %c0_i32_0 : i32, i32
  }
  func.func @transform_1(%arg0: i32, %arg1: memref<512xi32, #tpu.memory_space<smem>>) -> (i32, i32) {
    %c0_i32 = arith.constant 0 : i32
    %c0_i32_0 = arith.constant 0 : i32
    return %arg0, %c0_i32 : i32, i32
  }
}

</mosaic_0001>

<llo_original>
// kernel: neighbor_embedding1_forward.1
$region0: #{neighbor_embedding1_forward.1}
  #allocation0 [shape = 'u32[]', space=smem, size = 0x4, offset = 0x4, fixed_abs, tag = 'smem constant byte address 0x4 - core index']
  #allocation1 [shape = 'u32[144,128]{1,0:T(1,128)}', space=vmem, size = 0x12000, scoped, tag = 'internal scratch']
  #allocation2 [shape = 's32[1]{0}', space=sflag, size = 0x4, scoped, tag = 'scoped memory for neighbor_embedding1_forward.1']
  #allocation3 [shape = 'u8[2048]{0}', space=smem, size = 0x800, scoped, tag = 'prefetched SMEM operand 0']
  %s0 = inlined_call_operand.vmem [shape: s32[512], index: 0, kind: input, shape index: {}]
  %s1 = inlined_call_operand.hbm [shape: f32[64,128], index: 1, kind: input, shape index: {}]
  %s2 = inlined_call_operand.vmem [shape: f32[512,128], index: 2, kind: output, shape index: {}]
  %s3 = sld [smem:[#allocation0]]
  $region48: #{neighbor_embedding1_forward.1} parent=0
    _
  %s5 = ssub.s32 1, %s3
  %s6 = scalar_select 0, %s5, %s3
  %s7 = sshll.u32 %s0, 4
  %s8 = int_to_ptr.vmem [resolvable:$true] %s7
  %10 = dma.vmem_to_smem %s8, 64, [#allocation3], [#allocation2]
  %11 = dma.done [#allocation2], 64
  %12 = sfence
  $region1: #{neighbor_embedding1_forward.1} parent=0
    #allocation4 [shape = 'u8[32768]{0}', space=vmem, size = 0x8000, scoped, tag = 'input window, operand 1, single buffered']
    #allocation5 [shape = 's32[2]{0}', space=sflag, size = 0x8, scoped, tag = 'scoped memory for neighbor_embedding1_forward.1']
    %13 = vsyncpa [#allocation5], 0
    loop: start=0, step=1, limit=4
    $region2: #{neighbor_embedding1_forward.1} parent=1 // loop_pre_header
      _
    $region3: #{neighbor_embedding1_forward.1} parent=1 // loop_header
      %s15 = sphi 0, %s19
      %p16 = scmp.ge.s32.totalorder %s15, 4
      %s23 = sphi 0, %s23
      %s25 = sphi 0, %s23
      %s26 = sphi 0, %s25
      %s40 = sphi 0, %s26
      %s46 = sphi 0, %s48
      %s49 = sphi 0, %s46
      %s50 = sphi 0, %s49
      %s66 = sphi 0, %s50
    $region4: #{neighbor_embedding1_forward.1} parent=1 // loop_header_branch
      %18 = sbr.rel (%p16) target = $region8
    $region5: #{neighbor_embedding1_forward.1} parent=1 // loop_body
      %s20 = ssub.s32 %s15, 1
      %s21 = ssub.s32 %s15, 2
      %s22 = sadd.s32 %s15, 1
      %s24 = sadd.s32 %s23, 1
      %p27 = scmp.eq.s32.totalorder %s15, 1
      %p28 = scmp.ne.s32.totalorder %s23, %s25
      %p29 = scmp.eq.s32.totalorder %s15, 0
      %p30 = por %p28, %p29
      %p31 = scmp.ne.s32.totalorder %s23, %s25
      %p32 = scmp.eq.s32.totalorder %s20, 1
      %p33 = por %p31, %p32
      %p34 = scmp.ne.s32.totalorder %s25, %s26
      %p35 = scmp.eq.s32.totalorder %s20, 0
      %p36 = por %p34, %p35
      %p37 = scmp.ne.s32.totalorder %s25, %s26
      %p38 = scmp.eq.s32.totalorder %s21, 1
      %p39 = por %p37, %p38
      %p41 = scmp.ne.s32.totalorder %s26, %s40
      %p42 = scmp.eq.s32.totalorder %s21, 0
      %p43 = por %p41, %p42
      %s44 = ssub.s32 %s15, %s22
      %p45 = scmp.eq.s32.totalorder %s44, 0
      %s47 = sadd.s32 %s46, 1
      %s48 = scalar_select %p45, %s46, %s47
      %p51 = pneg %p45
      %p52 = scmp.eq.s32.totalorder %s15, 1
      %p53 = por %p51, %p52
      %p54 = scmp.ne.s32.totalorder %s46, %s49
      %p55 = scmp.eq.s32.totalorder %s15, 0
      %p56 = por %p54, %p55
      %p57 = scmp.ne.s32.totalorder %s46, %s49
      %p58 = scmp.eq.s32.totalorder %s20, 1
      %p59 = por %p57, %p58
      %p60 = scmp.ne.s32.totalorder %s49, %s50
      %p61 = scmp.eq.s32.totalorder %s20, 0
      %p62 = por %p60, %p61
      %p63 = scmp.ne.s32.totalorder %s49, %s50
      %p64 = scmp.eq.s32.totalorder %s21, 1
      %p65 = por %p63, %p64
      %p67 = scmp.ne.s32.totalorder %s50, %s66
      %p68 = scmp.eq.s32.totalorder %s21, 0
      %p69 = por %p67, %p68
      %p70 = scmp.le.s32.totalorder 1, %s15
      %p71 = scmp.lt.s32.totalorder %s15, 3
      %p72 = pnand %p70, %p71
      %p73 = pneg %p72
      // Predicated region
      $region9: #{neighbor_embedding1_forward.1} parent=5 // pred_check
        _
      $region10: #{neighbor_embedding1_forward.1} parent=5 // pred_check_branch
        %75 = sbr.rel (%p72) target = $region12
      $region11: #{neighbor_embedding1_forward.1} parent=5 // pred_region
        %s76 = ssub.s32 %s15, 1
        // Predicated region
        $region13: #{neighbor_embedding1_forward.1} parent=11 // pred_check
          %p77 = pneg %p36
        $region14: #{neighbor_embedding1_forward.1} parent=11 // pred_check_branch
          %79 = sbr.rel (%p77) target = $region16
        $region15: #{neighbor_embedding1_forward.1} parent=11 // pred_region
          %s81 = ssub.s32 1024, 1024
          %82 = vsyncadd [#allocation5], %s81
          %s83 = sshll.u32 [#allocation4], 4
          %s84 = int_to_ptr.vmem [resolvable:$true] %s83
          %89 = dma.hbm_to_vmem [thread:$0]  %s1, 1024, %s84, [#allocation5], 128, 128, 8
        $region16: #{neighbor_embedding1_forward.1} parent=11 // pred_fallthru
          _
      $region12: #{neighbor_embedding1_forward.1} parent=5 // pred_fallthru
        _
      %p90 = scmp.lt.s32.totalorder %s15, 2
      // Predicated region
      $region17: #{neighbor_embedding1_forward.1} parent=5 // pred_check
        %p91 = pneg %p90
      $region18: #{neighbor_embedding1_forward.1} parent=5 // pred_check_branch
        %93 = sbr.rel (%p91) target = $region20
      $region19: #{neighbor_embedding1_forward.1} parent=5 // pred_region
        _
      $region20: #{neighbor_embedding1_forward.1} parent=5 // pred_fallthru
        _
      %p94 = scmp.le.s32.totalorder 1, %s15
      %p95 = scmp.lt.s32.totalorder %s15, 3
      %p96 = pnand %p94, %p95
      %p97 = pneg %p96
      // Predicated region
      $region21: #{neighbor_embedding1_forward.1} parent=5 // pred_check
        _
      $region22: #{neighbor_embedding1_forward.1} parent=5 // pred_check_branch
        %99 = sbr.rel (%p96) target = $region24
      $region23: #{neighbor_embedding1_forward.1} parent=5 // pred_region
        %s100 = ssub.s32 %s15, 1
        // Predicated region
        $region25: #{neighbor_embedding1_forward.1} parent=23 // pred_check
          %p101 = pneg %p36
        $region26: #{neighbor_embedding1_forward.1} parent=23 // pred_check_branch
          %103 = sbr.rel (%p101) target = $region28
        $region27: #{neighbor_embedding1_forward.1} parent=23 // pred_region
          %104 = dma.done [#allocation5], 1024
        $region28: #{neighbor_embedding1_forward.1} parent=23 // pred_fallthru
          _
        %p105 = pneg %p36
        %p106 = pneg %p33
        %p107 = pneg %p62
        %p108 = pneg %p59
        %s109 = smul.u32 32, %s20
        %p110 = scmp.lt.s32.totalorder %s109, 63
        %s111 = scalar_select %p110, %s109, 63
        %s112 = smul.addr %s111, 8
        %s113 = scalar_lea.vmem %s2, %s112
        %s114 = smul.u32 32, %s20
        %p115 = scmp.lt.s32.totalorder %s114, 63
        %s116 = scalar_select %p115, %s114, 63
        %s117 = smul.addr %s116, 8
        %s118 = scalar_lea.vmem %s2, %s117
        %s119 = smul.u32 32, %s20
        %s120 = smul.u32 %s20, 256
        loop: start=0, step=1, limit=256
        $region29: #{neighbor_embedding1_forward.1} parent=23 // loop_pre_header
          _
        $region30: #{neighbor_embedding1_forward.1} parent=23 // loop_header
          %s122 = sphi 0, %s126
          %p123 = scmp.ge.s32.totalorder %s122, 256
        $region31: #{neighbor_embedding1_forward.1} parent=23 // loop_header_branch
          %125 = sbr.rel (%p123) target = $region35
        $region32: #{neighbor_embedding1_forward.1} parent=23 // loop_body
          %s127 = sadd.s32 %s120, %s122
          %s128 = sld [smem:[#allocation3 + %s127]]
          %s129 = scalar_lea.vmem [#allocation4], %s128
          %v130 = vld [vmem:[%s129] sm:$0x1]
          %s131 = scalar_lea.vmem %s118, %s122
          %132 = vst [vmem:[%s131] sm:$0x1] %v130
        $region33: #{neighbor_embedding1_forward.1} parent=23 // loop_footer
          %s126 = sadd.s32 1, %s122
        $region34: #{neighbor_embedding1_forward.1} parent=23 // loop_footer_branch
          %121 = sbr.rel target = $region30
        $region35: #{neighbor_embedding1_forward.1} parent=23 // loop_exit
          _
        %v133 = vld [vmem:[%s118] sm:$0xff]
        %v134 = vld [vmem:[%s118 + $0x8] sm:$0xff]
        %v135 = vld [vmem:[%s118 + $0x10] sm:$0xff]
        %v136 = vld [vmem:[%s118 + $0x18] sm:$0xff]
        %v137 = vld [vmem:[%s118 + $0x20] sm:$0xff]
        %v138 = vld [vmem:[%s118 + $0x28] sm:$0xff]
        %v139 = vld [vmem:[%s118 + $0x30] sm:$0xff]
        %v140 = vld [vmem:[%s118 + $0x38] sm:$0xff]
        %v141 = vld [vmem:[%s118 + $0x40] sm:$0xff]
        %v142 = vld [vmem:[%s118 + $0x48] sm:$0xff]
        %v143 = vld [vmem:[%s118 + $0x50] sm:$0xff]
        %v144 = vld [vmem:[%s118 + $0x58] sm:$0xff]
        %v145 = vld [vmem:[%s118 + $0x60] sm:$0xff]
        %v146 = vld [vmem:[%s118 + $0x68] sm:$0xff]
        %v147 = vld [vmem:[%s118 + $0x70] sm:$0xff]
        %v148 = vld [vmem:[%s118 + $0x78] sm:$0xff]
        %v149 = vld [vmem:[%s118 + $0x80] sm:$0xff]
        %v150 = vld [vmem:[%s118 + $0x88] sm:$0xff]
        %v151 = vld [vmem:[%s118 + $0x90] sm:$0xff]
        %v152 = vld [vmem:[%s118 + $0x98] sm:$0xff]
        %v153 = vld [vmem:[%s118 + $0xa0] sm:$0xff]
        %v154 = vld [vmem:[%s118 + $0xa8] sm:$0xff]
        %v155 = vld [vmem:[%s118 + $0xb0] sm:$0xff]
        %v156 = vld [vmem:[%s118 + $0xb8] sm:$0xff]
        %v157 = vld [vmem:[%s118 + $0xc0] sm:$0xff]
        %v158 = vld [vmem:[%s118 + $0xc8] sm:$0xff]
        %v159 = vld [vmem:[%s118 + $0xd0] sm:$0xff]
        %v160 = vld [vmem:[%s118 + $0xd8] sm:$0xff]
        %v161 = vld [vmem:[%s118 + $0xe0] sm:$0xff]
        %v162 = vld [vmem:[%s118 + $0xe8] sm:$0xff]
        %v163 = vld [vmem:[%s118 + $0xf0] sm:$0xff]
        %v164 = vld [vmem:[%s118 + $0xf8] sm:$0xff]
        %v165 = vmul.f32 %v133, %v133
        %v166 = vmul.f32 %v134, %v134
        %v167 = vmul.f32 %v135, %v135
        %v168 = vmul.f32 %v136, %v136
        %v169 = vmul.f32 %v137, %v137
        %v170 = vmul.f32 %v138, %v138
        %v171 = vmul.f32 %v139, %v139
        %v172 = vmul.f32 %v140, %v140
        %v173 = vmul.f32 %v141, %v141
        %v174 = vmul.f32 %v142, %v142
        %v175 = vmul.f32 %v143, %v143
        %v176 = vmul.f32 %v144, %v144
        %v177 = vmul.f32 %v145, %v145
        %v178 = vmul.f32 %v146, %v146
        %v179 = vmul.f32 %v147, %v147
        %v180 = vmul.f32 %v148, %v148
        %v181 = vmul.f32 %v149, %v149
        %v182 = vmul.f32 %v150, %v150
        %v183 = vmul.f32 %v151, %v151
        %v184 = vmul.f32 %v152, %v152
        %v185 = vmul.f32 %v153, %v153
        %v186 = vmul.f32 %v154, %v154
        %v187 = vmul.f32 %v155, %v155
        %v188 = vmul.f32 %v156, %v156
        %v189 = vmul.f32 %v157, %v157
        %v190 = vmul.f32 %v158, %v158
        %v191 = vmul.f32 %v159, %v159
        %v192 = vmul.f32 %v160, %v160
        %v193 = vmul.f32 %v161, %v161
        %v194 = vmul.f32 %v162, %v162
        %v195 = vmul.f32 %v163, %v163
        %v196 = vmul.f32 %v164, %v164
        %197 = vadd.xlane.f32.xlu0 %v165
        %v198 = vpop.xlane.xlu0 %197
        %199 = vadd.xlane.f32.xlu0 %v166
        %v200 = vpop.xlane.xlu0 %199
        %201 = vadd.xlane.f32.xlu0 %v167
        %v202 = vpop.xlane.xlu0 %201
        %203 = vadd.xlane.f32.xlu0 %v168
        %v204 = vpop.xlane.xlu0 %203
        %205 = vadd.xlane.f32.xlu0 %v169
        %v206 = vpop.xlane.xlu0 %205
        %207 = vadd.xlane.f32.xlu0 %v170
        %v208 = vpop.xlane.xlu0 %207
        %209 = vadd.xlane.f32.xlu0 %v171
        %v210 = vpop.xlane.xlu0 %209
        %211 = vadd.xlane.f32.xlu0 %v172
        %v212 = vpop.xlane.xlu0 %211
        %213 = vadd.xlane.f32.xlu0 %v173
        %v214 = vpop.xlane.xlu0 %213
        %215 = vadd.xlane.f32.xlu0 %v174
        %v216 = vpop.xlane.xlu0 %215
        %217 = vadd.xlane.f32.xlu0 %v175
        %v218 = vpop.xlane.xlu0 %217
        %219 = vadd.xlane.f32.xlu0 %v176
        %v220 = vpop.xlane.xlu0 %219
        %221 = vadd.xlane.f32.xlu0 %v177
        %v222 = vpop.xlane.xlu0 %221
        %223 = vadd.xlane.f32.xlu0 %v178
        %v224 = vpop.xlane.xlu0 %223
        %225 = vadd.xlane.f32.xlu0 %v179
        %v226 = vpop.xlane.xlu0 %225
        %227 = vadd.xlane.f32.xlu0 %v180
        %v228 = vpop.xlane.xlu0 %227
        %229 = vadd.xlane.f32.xlu0 %v181
        %v230 = vpop.xlane.xlu0 %229
        %231 = vadd.xlane.f32.xlu0 %v182
        %v232 = vpop.xlane.xlu0 %231
        %233 = vadd.xlane.f32.xlu0 %v183
        %v234 = vpop.xlane.xlu0 %233
        %235 = vadd.xlane.f32.xlu0 %v184
        %v236 = vpop.xlane.xlu0 %235
        %237 = vadd.xlane.f32.xlu0 %v185
        %v238 = vpop.xlane.xlu0 %237
        %239 = vadd.xlane.f32.xlu0 %v186
        %v240 = vpop.xlane.xlu0 %239
        %241 = vadd.xlane.f32.xlu0 %v187
        %v242 = vpop.xlane.xlu0 %241
        %243 = vadd.xlane.f32.xlu0 %v188
        %v244 = vpop.xlane.xlu0 %243
        %245 = vadd.xlane.f32.xlu0 %v189
        %v246 = vpop.xlane.xlu0 %245
        %247 = vadd.xlane.f32.xlu0 %v190
        %v248 = vpop.xlane.xlu0 %247
        %249 = vadd.xlane.f32.xlu0 %v191
        %v250 = vpop.xlane.xlu0 %249
        %251 = vadd.xlane.f32.xlu0 %v192
        %v252 = vpop.xlane.xlu0 %251
        %253 = vadd.xlane.f32.xlu0 %v193
        %v254 = vpop.xlane.xlu0 %253
        %255 = vadd.xlane.f32.xlu0 %v194
        %v256 = vpop.xlane.xlu0 %255
        %257 = vadd.xlane.f32.xlu0 %v195
        %v258 = vpop.xlane.xlu0 %257
        %259 = vadd.xlane.f32.xlu0 %v196
        %v260 = vpop.xlane.xlu0 %259
        %v261 = vrsqrt.pop %v198
        %v262 = vmul.f32 %v198, %v261
        %vm263 = vcmp.eq.f32.partialorder %v198, inf
        %v264 = vsel %vm263, %v198, %v262
        %vm265 = vcmp.eq.f32.partialorder %v198, 0.0
        %v266 = vand.u32 %v198, 2147483648
        %v267 = vsel %vm265, %v266, %v264
        %v268 = vrsqrt.pop %v200
        %v269 = vmul.f32 %v200, %v268
        %vm270 = vcmp.eq.f32.partialorder %v200, inf
        %v271 = vsel %vm270, %v200, %v269
        %vm272 = vcmp.eq.f32.partialorder %v200, 0.0
        %v273 = vand.u32 %v200, 2147483648
        %v274 = vsel %vm272, %v273, %v271
        %v275 = vrsqrt.pop %v202
        %v276 = vmul.f32 %v202, %v275
        %vm277 = vcmp.eq.f32.partialorder %v202, inf
        %v278 = vsel %vm277, %v202, %v276
        %vm279 = vcmp.eq.f32.partialorder %v202, 0.0
        %v280 = vand.u32 %v202, 2147483648
        %v281 = vsel %vm279, %v280, %v278
        %v282 = vrsqrt.pop %v204
        %v283 = vmul.f32 %v204, %v282
        %vm284 = vcmp.eq.f32.partialorder %v204, inf
        %v285 = vsel %vm284, %v204, %v283
        %vm286 = vcmp.eq.f32.partialorder %v204, 0.0
        %v287 = vand.u32 %v204, 2147483648
        %v288 = vsel %vm286, %v287, %v285
        %v289 = vrsqrt.pop %v206
        %v290 = vmul.f32 %v206, %v289
        %vm291 = vcmp.eq.f32.partialorder %v206, inf
        %v292 = vsel %vm291, %v206, %v290
        %vm293 = vcmp.eq.f32.partialorder %v206, 0.0
        %v294 = vand.u32 %v206, 2147483648
        %v295 = vsel %vm293, %v294, %v292
        %v296 = vrsqrt.pop %v208
        %v297 = vmul.f32 %v208, %v296
        %vm298 = vcmp.eq.f32.partialorder %v208, inf
        %v299 = vsel %vm298, %v208, %v297
        %vm300 = vcmp.eq.f32.partialorder %v208, 0.0
        %v301 = vand.u32 %v208, 2147483648
        %v302 = vsel %vm300, %v301, %v299
        %v303 = vrsqrt.pop %v210
        %v304 = vmul.f32 %v210, %v303
        %vm305 = vcmp.eq.f32.partialorder %v210, inf
        %v306 = vsel %vm305, %v210, %v304
        %vm307 = vcmp.eq.f32.partialorder %v210, 0.0
        %v308 = vand.u32 %v210, 2147483648
        %v309 = vsel %vm307, %v308, %v306
        %v310 = vrsqrt.pop %v212
        %v311 = vmul.f32 %v212, %v310
        %vm312 = vcmp.eq.f32.partialorder %v212, inf
        %v313 = vsel %vm312, %v212, %v311
        %vm314 = vcmp.eq.f32.partialorder %v212, 0.0
        %v315 = vand.u32 %v212, 2147483648
        %v316 = vsel %vm314, %v315, %v313
        %v317 = vrsqrt.pop %v214
        %v318 = vmul.f32 %v214, %v317
        %vm319 = vcmp.eq.f32.partialorder %v214, inf
        %v320 = vsel %vm319, %v214, %v318
        %vm321 = vcmp.eq.f32.partialorder %v214, 0.0
        %v322 = vand.u32 %v214, 2147483648
        %v323 = vsel %vm321, %v322, %v320
        %v324 = vrsqrt.pop %v216
        %v325 = vmul.f32 %v216, %v324
        %vm326 = vcmp.eq.f32.partialorder %v216, inf
        %v327 = vsel %vm326, %v216, %v325
        %vm328 = vcmp.eq.f32.partialorder %v216, 0.0
        %v329 = vand.u32 %v216, 2147483648
        %v330 = vsel %vm328, %v329, %v327
        %v331 = vrsqrt.pop %v218
        %v332 = vmul.f32 %v218, %v331
        %vm333 = vcmp.eq.f32.partialorder %v218, inf
        %v334 = vsel %vm333, %v218, %v332
        %vm335 = vcmp.eq.f32.partialorder %v218, 0.0
        %v336 = vand.u32 %v218, 2147483648
        %v337 = vsel %vm335, %v336, %v334
        %v338 = vrsqrt.pop %v220
        %v339 = vmul.f32 %v220, %v338
        %vm340 = vcmp.eq.f32.partialorder %v220, inf
        %v341 = vsel %vm340, %v220, %v339
        %vm342 = vcmp.eq.f32.partialorder %v220, 0.0
        %v343 = vand.u32 %v220, 2147483648
        %v344 = vsel %vm342, %v343, %v341
        %v345 = vrsqrt.pop %v222
        %v346 = vmul.f32 %v222, %v345
        %vm347 = vcmp.eq.f32.partialorder %v222, inf
        %v348 = vsel %vm347, %v222, %v346
        %vm349 = vcmp.eq.f32.partialorder %v222, 0.0
        %v350 = vand.u32 %v222, 2147483648
        %v351 = vsel %vm349, %v350, %v348
        %v352 = vrsqrt.pop %v224
        %v353 = vmul.f32 %v224, %v352
        %vm354 = vcmp.eq.f32.partialorder %v224, inf
        %v355 = vsel %vm354, %v224, %v353
        %vm356 = vcmp.eq.f32.partialorder %v224, 0.0
        %v357 = vand.u32 %v224, 2147483648
        %v358 = vsel %vm356, %v357, %v355
        %v359 = vrsqrt.pop %v226
        %v360 = vmul.f32 %v226, %v359
        %vm361 = vcmp.eq.f32.partialorder %v226, inf
        %v362 = vsel %vm361, %v226, %v360
        %vm363 = vcmp.eq.f32.partialorder %v226, 0.0
        %v364 = vand.u32 %v226, 2147483648
        %v365 = vsel %vm363, %v364, %v362
        %v366 = vrsqrt.pop %v228
        %v367 = vmul.f32 %v228, %v366
        %vm368 = vcmp.eq.f32.partialorder %v228, inf
        %v369 = vsel %vm368, %v228, %v367
        %vm370 = vcmp.eq.f32.partialorder %v228, 0.0
        %v371 = vand.u32 %v228, 2147483648
        %v372 = vsel %vm370, %v371, %v369
        %v373 = vrsqrt.pop %v230
        %v374 = vmul.f32 %v230, %v373
        %vm375 = vcmp.eq.f32.partialorder %v230, inf
        %v376 = vsel %vm375, %v230, %v374
        %vm377 = vcmp.eq.f32.partialorder %v230, 0.0
        %v378 = vand.u32 %v230, 2147483648
        %v379 = vsel %vm377, %v378, %v376
        %v380 = vrsqrt.pop %v232
        %v381 = vmul.f32 %v232, %v380
        %vm382 = vcmp.eq.f32.partialorder %v232, inf
        %v383 = vsel %vm382, %v232, %v381
        %vm384 = vcmp.eq.f32.partialorder %v232, 0.0
        %v385 = vand.u32 %v232, 2147483648
        %v386 = vsel %vm384, %v385, %v383
        %v387 = vrsqrt.pop %v234
        %v388 = vmul.f32 %v234, %v387
        %vm389 = vcmp.eq.f32.partialorder %v234, inf
        %v390 = vsel %vm389, %v234, %v388
        %vm391 = vcmp.eq.f32.partialorder %v234, 0.0
        %v392 = vand.u32 %v234, 2147483648
        %v393 = vsel %vm391, %v392, %v390
        %v394 = vrsqrt.pop %v236
        %v395 = vmul.f32 %v236, %v394
        %vm396 = vcmp.eq.f32.partialorder %v236, inf
        %v397 = vsel %vm396, %v236, %v395
        %vm398 = vcmp.eq.f32.partialorder %v236, 0.0
        %v399 = vand.u32 %v236, 2147483648
        %v400 = vsel %vm398, %v399, %v397
        %v401 = vrsqrt.pop %v238
        %v402 = vmul.f32 %v238, %v401
        %vm403 = vcmp.eq.f32.partialorder %v238, inf
        %v404 = vsel %vm403, %v238, %v402
        %vm405 = vcmp.eq.f32.partialorder %v238, 0.0
        %v406 = vand.u32 %v238, 2147483648
        %v407 = vsel %vm405, %v406, %v404
        %v408 = vrsqrt.pop %v240
        %v409 = vmul.f32 %v240, %v408
        %vm410 = vcmp.eq.f32.partialorder %v240, inf
        %v411 = vsel %vm410, %v240, %v409
        %vm412 = vcmp.eq.f32.partialorder %v240, 0.0
        %v413 = vand.u32 %v240, 2147483648
        %v414 = vsel %vm412, %v413, %v411
        %v415 = vrsqrt.pop %v242
        %v416 = vmul.f32 %v242, %v415
        %vm417 = vcmp.eq.f32.partialorder %v242, inf
        %v418 = vsel %vm417, %v242, %v416
        %vm419 = vcmp.eq.f32.partialorder %v242, 0.0
        %v420 = vand.u32 %v242, 2147483648
        %v421 = vsel %vm419, %v420, %v418
        %v422 = vrsqrt.pop %v244
        %v423 = vmul.f32 %v244, %v422
        %vm424 = vcmp.eq.f32.partialorder %v244, inf
        %v425 = vsel %vm424, %v244, %v423
        %vm426 = vcmp.eq.f32.partialorder %v244, 0.0
        %v427 = vand.u32 %v244, 2147483648
        %v428 = vsel %vm426, %v427, %v425
        %v429 = vrsqrt.pop %v246
        %v430 = vmul.f32 %v246, %v429
        %vm431 = vcmp.eq.f32.partialorder %v246, inf
        %v432 = vsel %vm431, %v246, %v430
        %vm433 = vcmp.eq.f32.partialorder %v246, 0.0
        %v434 = vand.u32 %v246, 2147483648
        %v435 = vsel %vm433, %v434, %v432
        %v436 = vrsqrt.pop %v248
        %v437 = vmul.f32 %v248, %v436
        %vm438 = vcmp.eq.f32.partialorder %v248, inf
        %v439 = vsel %vm438, %v248, %v437
        %vm440 = vcmp.eq.f32.partialorder %v248, 0.0
        %v441 = vand.u32 %v248, 2147483648
        %v442 = vsel %vm440, %v441, %v439
        %v443 = vrsqrt.pop %v250
        %v444 = vmul.f32 %v250, %v443
        %vm445 = vcmp.eq.f32.partialorder %v250, inf
        %v446 = vsel %vm445, %v250, %v444
        %vm447 = vcmp.eq.f32.partialorder %v250, 0.0
        %v448 = vand.u32 %v250, 2147483648
        %v449 = vsel %vm447, %v448, %v446
        %v450 = vrsqrt.pop %v252
        %v451 = vmul.f32 %v252, %v450
        %vm452 = vcmp.eq.f32.partialorder %v252, inf
        %v453 = vsel %vm452, %v252, %v451
        %vm454 = vcmp.eq.f32.partialorder %v252, 0.0
        %v455 = vand.u32 %v252, 2147483648
        %v456 = vsel %vm454, %v455, %v453
        %v457 = vrsqrt.pop %v254
        %v458 = vmul.f32 %v254, %v457
        %vm459 = vcmp.eq.f32.partialorder %v254, inf
        %v460 = vsel %vm459, %v254, %v458
        %vm461 = vcmp.eq.f32.partialorder %v254, 0.0
        %v462 = vand.u32 %v254, 2147483648
        %v463 = vsel %vm461, %v462, %v460
        %v464 = vrsqrt.pop %v256
        %v465 = vmul.f32 %v256, %v464
        %vm466 = vcmp.eq.f32.partialorder %v256, inf
        %v467 = vsel %vm466, %v256, %v465
        %vm468 = vcmp.eq.f32.partialorder %v256, 0.0
        %v469 = vand.u32 %v256, 2147483648
        %v470 = vsel %vm468, %v469, %v467
        %v471 = vrsqrt.pop %v258
        %v472 = vmul.f32 %v258, %v471
        %vm473 = vcmp.eq.f32.partialorder %v258, inf
        %v474 = vsel %vm473, %v258, %v472
        %vm475 = vcmp.eq.f32.partialorder %v258, 0.0
        %v476 = vand.u32 %v258, 2147483648
        %v477 = vsel %vm475, %v476, %v474
        %v478 = vrsqrt.pop %v260
        %v479 = vmul.f32 %v260, %v478
        %vm480 = vcmp.eq.f32.partialorder %v260, inf
        %v481 = vsel %vm480, %v260, %v479
        %vm482 = vcmp.eq.f32.partialorder %v260, 0.0
        %v483 = vand.u32 %v260, 2147483648
        %v484 = vsel %vm482, %v483, %v481
        %v485 = vmax.f32 %v267, 1e-12
        %v486 = vmax.f32 %v274, 1e-12
        %v487 = vmax.f32 %v281, 1e-12
        %v488 = vmax.f32 %v288, 1e-12
        %v489 = vmax.f32 %v295, 1e-12
        %v490 = vmax.f32 %v302, 1e-12
        %v491 = vmax.f32 %v309, 1e-12
        %v492 = vmax.f32 %v316, 1e-12
        %v493 = vmax.f32 %v323, 1e-12
        %v494 = vmax.f32 %v330, 1e-12
        %v495 = vmax.f32 %v337, 1e-12
        %v496 = vmax.f32 %v344, 1e-12
        %v497 = vmax.f32 %v351, 1e-12
        %v498 = vmax.f32 %v358, 1e-12
        %v499 = vmax.f32 %v365, 1e-12
        %v500 = vmax.f32 %v372, 1e-12
        %v501 = vmax.f32 %v379, 1e-12
        %v502 = vmax.f32 %v386, 1e-12
        %v503 = vmax.f32 %v393, 1e-12
        %v504 = vmax.f32 %v400, 1e-12
        %v505 = vmax.f32 %v407, 1e-12
        %v506 = vmax.f32 %v414, 1e-12
        %v507 = vmax.f32 %v421, 1e-12
        %v508 = vmax.f32 %v428, 1e-12
        %v509 = vmax.f32 %v435, 1e-12
        %v510 = vmax.f32 %v442, 1e-12
        %v511 = vmax.f32 %v449, 1e-12
        %v512 = vmax.f32 %v456, 1e-12
        %v513 = vmax.f32 %v463, 1e-12
        %v514 = vmax.f32 %v470, 1e-12
        %v515 = vmax.f32 %v477, 1e-12
        %v516 = vmax.f32 %v484, 1e-12
        %v517 = vrcp.pop %v485
        %v518 = vmul.f32 1.0, %v517
        %v519 = vrcp.pop %v486
        %v520 = vmul.f32 1.0, %v519
        %v521 = vrcp.pop %v487
        %v522 = vmul.f32 1.0, %v521
        %v523 = vrcp.pop %v488
        %v524 = vmul.f32 1.0, %v523
        %v525 = vrcp.pop %v489
        %v526 = vmul.f32 1.0, %v525
        %v527 = vrcp.pop %v490
        %v528 = vmul.f32 1.0, %v527
        %v529 = vrcp.pop %v491
        %v530 = vmul.f32 1.0, %v529
        %v531 = vrcp.pop %v492
        %v532 = vmul.f32 1.0, %v531
        %v533 = vrcp.pop %v493
        %v534 = vmul.f32 1.0, %v533
        %v535 = vrcp.pop %v494
        %v536 = vmul.f32 1.0, %v535
        %v537 = vrcp.pop %v495
        %v538 = vmul.f32 1.0, %v537
        %v539 = vrcp.pop %v496
        %v540 = vmul.f32 1.0, %v539
        %v541 = vrcp.pop %v497
        %v542 = vmul.f32 1.0, %v541
        %v543 = vrcp.pop %v498
        %v544 = vmul.f32 1.0, %v543
        %v545 = vrcp.pop %v499
        %v546 = vmul.f32 1.0, %v545
        %v547 = vrcp.pop %v500
        %v548 = vmul.f32 1.0, %v547
        %v549 = vrcp.pop %v501
        %v550 = vmul.f32 1.0, %v549
        %v551 = vrcp.pop %v502
        %v552 = vmul.f32 1.0, %v551
        %v553 = vrcp.pop %v503
        %v554 = vmul.f32 1.0, %v553
        %v555 = vrcp.pop %v504
        %v556 = vmul.f32 1.0, %v555
        %v557 = vrcp.pop %v505
        %v558 = vmul.f32 1.0, %v557
        %v559 = vrcp.pop %v506
        %v560 = vmul.f32 1.0, %v559
        %v561 = vrcp.pop %v507
        %v562 = vmul.f32 1.0, %v561
        %v563 = vrcp.pop %v508
        %v564 = vmul.f32 1.0, %v563
        %v565 = vrcp.pop %v509
        %v566 = vmul.f32 1.0, %v565
        %v567 = vrcp.pop %v510
        %v568 = vmul.f32 1.0, %v567
        %v569 = vrcp.pop %v511
        %v570 = vmul.f32 1.0, %v569
        %v571 = vrcp.pop %v512
        %v572 = vmul.f32 1.0, %v571
        %v573 = vrcp.pop %v513
        %v574 = vmul.f32 1.0, %v573
        %v575 = vrcp.pop %v514
        %v576 = vmul.f32 1.0, %v575
        %v577 = vrcp.pop %v515
        %v578 = vmul.f32 1.0, %v577
        %v579 = vrcp.pop %v516
        %v580 = vmul.f32 1.0, %v579
        %v581 = vmul.f32 %v133, %v518
        %v582 = vmul.f32 %v134, %v520
        %v583 = vmul.f32 %v135, %v522
        %v584 = vmul.f32 %v136, %v524
        %v585 = vmul.f32 %v137, %v526
        %v586 = vmul.f32 %v138, %v528
        %v587 = vmul.f32 %v139, %v530
        %v588 = vmul.f32 %v140, %v532
        %v589 = vmul.f32 %v141, %v534
        %v590 = vmul.f32 %v142, %v536
        %v591 = vmul.f32 %v143, %v538
        %v592 = vmul.f32 %v144, %v540
        %v593 = vmul.f32 %v145, %v542
        %v594 = vmul.f32 %v146, %v544
        %v595 = vmul.f32 %v147, %v546
        %v596 = vmul.f32 %v148, %v548
        %v597 = vmul.f32 %v149, %v550
        %v598 = vmul.f32 %v150, %v552
        %v599 = vmul.f32 %v151, %v554
        %v600 = vmul.f32 %v152, %v556
        %v601 = vmul.f32 %v153, %v558
        %v602 = vmul.f32 %v154, %v560
        %v603 = vmul.f32 %v155, %v562
        %v604 = vmul.f32 %v156, %v564
        %v605 = vmul.f32 %v157, %v566
        %v606 = vmul.f32 %v158, %v568
        %v607 = vmul.f32 %v159, %v570
        %v608 = vmul.f32 %v160, %v572
        %v609 = vmul.f32 %v161, %v574
        %v610 = vmul.f32 %v162, %v576
        %v611 = vmul.f32 %v163, %v578
        %v612 = vmul.f32 %v164, %v580
        %613 = vst [vmem:[%s118] sm:$0xff] %v581
        %614 = vst [vmem:[%s118 + $0x8] sm:$0xff] %v582
        %615 = vst [vmem:[%s118 + $0x10] sm:$0xff] %v583
        %616 = vst [vmem:[%s118 + $0x18] sm:$0xff] %v584
        %617 = vst [vmem:[%s118 + $0x20] sm:$0xff] %v585
        %618 = vst [vmem:[%s118 + $0x28] sm:$0xff] %v586
        %619 = vst [vmem:[%s118 + $0x30] sm:$0xff] %v587
        %620 = vst [vmem:[%s118 + $0x38] sm:$0xff] %v588
        %621 = vst [vmem:[%s118 + $0x40] sm:$0xff] %v589
        %622 = vst [vmem:[%s118 + $0x48] sm:$0xff] %v590
        %623 = vst [vmem:[%s118 + $0x50] sm:$0xff] %v591
        %624 = vst [vmem:[%s118 + $0x58] sm:$0xff] %v592
        %625 = vst [vmem:[%s118 + $0x60] sm:$0xff] %v593
        %626 = vst [vmem:[%s118 + $0x68] sm:$0xff] %v594
        %627 = vst [vmem:[%s118 + $0x70] sm:$0xff] %v595
        %628 = vst [vmem:[%s118 + $0x78] sm:$0xff] %v596
        %629 = vst [vmem:[%s118 + $0x80] sm:$0xff] %v597
        %630 = vst [vmem:[%s118 + $0x88] sm:$0xff] %v598
        %631 = vst [vmem:[%s118 + $0x90] sm:$0xff] %v599
        %632 = vst [vmem:[%s118 + $0x98] sm:$0xff] %v600
        %633 = vst [vmem:[%s118 + $0xa0] sm:$0xff] %v601
        %634 = vst [vmem:[%s118 + $0xa8] sm:$0xff] %v602
        %635 = vst [vmem:[%s118 + $0xb0] sm:$0xff] %v603
        %636 = vst [vmem:[%s118 + $0xb8] sm:$0xff] %v604
        %637 = vst [vmem:[%s118 + $0xc0] sm:$0xff] %v605
        %638 = vst [vmem:[%s118 + $0xc8] sm:$0xff] %v606
        %639 = vst [vmem:[%s118 + $0xd0] sm:$0xff] %v607
        %640 = vst [vmem:[%s118 + $0xd8] sm:$0xff] %v608
        %641 = vst [vmem:[%s118 + $0xe0] sm:$0xff] %v609
        %642 = vst [vmem:[%s118 + $0xe8] sm:$0xff] %v610
        %643 = vst [vmem:[%s118 + $0xf0] sm:$0xff] %v611
        %644 = vst [vmem:[%s118 + $0xf8] sm:$0xff] %v612
        %s645 = smul.u32 32, %s20
        %p646 = scmp.lt.s32.totalorder %s645, 63
        %s647 = scalar_select %p646, %s645, 63
        %s648 = smul.addr %s647, 8
        %s649 = scalar_lea.vmem %s2, %s648
        // Predicated region
        $region36: #{neighbor_embedding1_forward.1} parent=23 // pred_check
          %p650 = pneg %p59
        $region37: #{neighbor_embedding1_forward.1} parent=23 // pred_check_branch
          %652 = sbr.rel (%p650) target = $region39
        $region38: #{neighbor_embedding1_forward.1} parent=23 // pred_region
          %s653 = smul.u32 32, %s20
        $region39: #{neighbor_embedding1_forward.1} parent=23 // pred_fallthru
          _
      $region24: #{neighbor_embedding1_forward.1} parent=5 // pred_fallthru
        _
      %p654 = scmp.le.s32.totalorder 2, %s15
      // Predicated region
      $region40: #{neighbor_embedding1_forward.1} parent=5 // pred_check
        %p655 = pneg %p654
      $region41: #{neighbor_embedding1_forward.1} parent=5 // pred_check_branch
        %657 = sbr.rel (%p655) target = $region43
      $region42: #{neighbor_embedding1_forward.1} parent=5 // pred_region
        %s658 = ssub.s32 %s15, 2
        // Predicated region
        $region44: #{neighbor_embedding1_forward.1} parent=42 // pred_check
          %p659 = pneg %p65
        $region45: #{neighbor_embedding1_forward.1} parent=42 // pred_check_branch
          %661 = sbr.rel (%p659) target = $region47
        $region46: #{neighbor_embedding1_forward.1} parent=42 // pred_region
          %s662 = smul.u32 32, %s21
          %p663 = scmp.lt.s32.totalorder %s662, 63
          %s664 = scalar_select %p663, %s662, 63
          %s665 = smul.addr %s664, 8
          %s666 = scalar_lea.vmem %s2, %s665
        $region47: #{neighbor_embedding1_forward.1} parent=42 // pred_fallthru
          _
      $region43: #{neighbor_embedding1_forward.1} parent=5 // pred_fallthru
        _
    $region6: #{neighbor_embedding1_forward.1} parent=1 // loop_footer
      %s19 = sadd.s32 1, %s15
    $region7: #{neighbor_embedding1_forward.1} parent=1 // loop_footer_branch
      %14 = sbr.rel target = $region3
    $region8: #{neighbor_embedding1_forward.1} parent=1 // loop_exit
      _
    %667 = vsyncpa [#allocation5], 1
    %s668 = scalar_lea.sflag [#allocation5], 1
    %669 = vsyncpa %s668, 1

</llo_original>
